<compile_context>
chip_gen: v7x
topology: tpu7x:2x2x1
jax: 0.10.0
libtpu: 0.0.40
codegen_flags: <defaults>
</compile_context>

<pallas_src>
import functools

import jax
import jax.numpy as jnp
from jax.experimental import pallas as pl
from jax.experimental.pallas import tpu as pltpu

block_size = 256
n_embd = 192


def masked_head_kernel(x_ref, w_ref, bias_ref, o_ref, *, use_bf16_exp):
    # x_ref:    (Bb, T, C)  f32   batch-block of inputs
    # w_ref:    (C, 3H)     bf16  fused [Wk | Wq*H^-0.5 | Wv] (pre-scaled, pre-cast)
    # bias_ref: (T, T)      f32   additive causal bias (0 on/below diag, -1e30 above)
    # o_ref:    (Bb, T, H)
    Bb, T, C = x_ref.shape
    H = o_ref.shape[-1]

    # Fused QKV projection: single wide (M=Bb*T, N=3H) bf16 MXU matmul, f32 acc.
    x2d = x_ref[...].reshape(Bb * T, C).astype(jnp.bfloat16)
    qkv = jnp.dot(x2d, w_ref[...], preferred_element_type=jnp.float32)   # (Bb*T, 3H)
    qkv = qkv.reshape(Bb, T, 3 * H)

    k = qkv[:, :, 0 * H:1 * H].astype(jnp.bfloat16)        # (Bb, T, H)
    q = qkv[:, :, 1 * H:2 * H].astype(jnp.bfloat16)        # scale already folded into Wq
    v = qkv[:, :, 2 * H:3 * H]                             # (Bb, T, H) f32

    # Append a ones column to v: the softmax row-sum then falls out of the MXU
    # (column H of e @ v_aug) instead of a cross-lane XLU reduce over (Bb,T,T).
    ones_col = jnp.ones((Bb, T, 1), jnp.float32)
    v_aug = jnp.concatenate([v, ones_col], axis=-1).astype(jnp.bfloat16)  # (Bb,T,H+1)

    # q @ k^T without materializing a transpose (contract last dims).
    scores = jnp.einsum('bqh,bkh->bqk', q, k,
                        preferred_element_type=jnp.float32)               # (Bb,T,T) f32

    # Causal mask as a precomputed additive bias (no per-step iota/compare/select).
    wei = scores + bias_ref[...]

    # Numerically stable softmax numerator; normalization deferred.
    m = jnp.max(wei, axis=-1, keepdims=True)
    if use_bf16_exp:
        # v6e / v7x: EUP supports bf16 -> ~2x exp throughput + one fewer cast pass.
        e = jnp.exp((wei - m).astype(jnp.bfloat16))
    else:
        # v5e: no bf16 VPU/EUP -> exp in f32, cast the result once for the MXU.
        e = jnp.exp(wei - m).astype(jnp.bfloat16)

    # dropout is identity in eval mode.

    # One MXU matmul gives both the weighted values (cols 0:H) and the softmax
    # denominator (col H); normalize only the small (Bb,T,H) result.
    ov = jnp.einsum('bqk,bkh->bqh', e, v_aug,
                    preferred_element_type=jnp.float32)                   # (Bb,T,H+1)
    out = ov[:, :, :H]
    s = ov[:, :, H:H + 1]
    out = out * pl.reciprocal(s, approx=True)
    o_ref[...] = out.astype(o_ref.dtype)


def _tpu_generation():
    """Best-effort TPU generation from device_kind; None if undetectable."""
    try:
        kind = jax.devices()[0].device_kind.lower()
    except Exception:
        return None
    for tag, gen in (("v7", 7), ("v6", 6), ("v5", 5), ("v4", 4), ("v3", 3), ("v2", 2)):
        if tag in kind:
            return gen
    return None


def _pick_bb(B, gen):
    """Batch elements per grid step, tuned per TPU generation."""
    if gen is not None and gen >= 7:
        cap, min_steps = 8, 4      # >=2 grid steps per v7x TensorCore; 64 MiB phys VMEM
    elif gen == 6:
        cap, min_steps = 16, 2     # amortize ~600-cycle step overhead; 128 MiB phys VMEM
    elif gen is not None and gen <= 5:
        cap, min_steps = 4, 1      # v5e: 16 MiB default scoped VMEM
    else:
        cap, min_steps = 8, 2
    target = min(max(1, B // min_steps), cap)
    bb = 1
    for cand in range(1, target + 1):
        if B % cand == 0:
            bb = cand
    return bb


@functools.partial(jax.jit, static_argnames=("bb",))
def masked_head(x, wk, wq, wv, *, bb=None):
    """x: (B, T, C) f32; wk/wq/wv: (C, H) f32 (already transposed). Returns (B, T, H)."""
    B, T, C = x.shape
    H = wk.shape[1]
    assert T <= block_size

    gen = _tpu_generation()
    if bb is None:
        bb = _pick_bb(B, gen)
    assert B % bb == 0
    use_bf16_exp = gen is not None and gen >= 6   # bf16 EUP only on v6e/v7x

    # Fold 1/sqrt(H) into Wq, fuse to one weight, pre-cast to bf16 (block is
    # fetched once; avoids a per-grid-step cast inside the kernel).
    w_qkv = jnp.concatenate([wk, wq * (H ** -0.5), wv], axis=1).astype(jnp.bfloat16)
    # Additive causal bias; constant-folds under jit.
    tril = jnp.tril(jnp.ones((T, T), dtype=bool))
    bias = jnp.where(tril, jnp.float32(0.0), jnp.float32(-1e30))          # (T, T)

    flops = (2 * B * T * C * 3 * H          # QKV projection
             + 2 * B * T * T * H            # Q K^T
             + 2 * B * T * T * (H + 1))     # e @ [v | 1]
    bytes_accessed = x.size * 4 + w_qkv.size * 2 + bias.size * 4 + B * T * H * 4
    cost = pl.CostEstimate(flops=flops, transcendentals=B * T * T,
                           bytes_accessed=bytes_accessed)

    compiler_kwargs = dict(dimension_semantics=("parallel",))
    if gen == 6:
        compiler_kwargs["vmem_limit_bytes"] = 64 << 20   # headroom for bb=16

    return pl.pallas_call(
        functools.partial(masked_head_kernel, use_bf16_exp=use_bf16_exp),
        out_shape=jax.ShapeDtypeStruct((B, T, H), x.dtype),
        grid_spec=pltpu.PrefetchScalarGridSpec(
            num_scalar_prefetch=0,
            grid=(B // bb,),
            in_specs=[
                pl.BlockSpec((bb, T, C), lambda b: (b, 0, 0)),
                pl.BlockSpec((C, 3 * H), lambda b: (0, 0)),   # revisited: fetched once
                pl.BlockSpec((T, T), lambda b: (0, 0)),       # revisited: fetched once
            ],
            out_specs=pl.BlockSpec((bb, T, H), lambda b: (b, 0, 0)),
        ),
        compiler_params=pltpu.CompilerParams(**compiler_kwargs),
        cost_estimate=cost,
    )(x, w_qkv, bias)


def masked_head_ref(x, wk, wq, wv):
    k = x @ wk
    q = x @ wq
    v = x @ wv
    hs = wk.shape[1]
    wei = (q @ jnp.swapaxes(k, -2, -1)) * hs ** -0.5
    T = x.shape[1]
    tril = jnp.tril(jnp.ones((T, T), dtype=bool))
    wei = jnp.where(tril, wei, -jnp.inf)
    wei = jax.nn.softmax(wei, axis=-1)
    return wei @ v


if __name__ == "__main__":
    head_size = 32
    base_key = jax.random.PRNGKey(0)

    def run_case(B, T):
        kx, kk, kq, kv = jax.random.split(jax.random.fold_in(base_key, T), 4)
        x = jax.random.normal(kx, (B, T, n_embd), dtype=jnp.float32)
        # nn.Linear(n_embd, head_size, bias=False) weight is (head_size, n_embd);
        # stored transposed (n_embd, head_size) for the kernel.
        wscale = n_embd ** -0.5
        wk = jax.random.uniform(kk, (n_embd, head_size), jnp.float32, -wscale, wscale)
        wq = jax.random.uniform(kq, (n_embd, head_size), jnp.float32, -wscale, wscale)
        wv = jax.random.uniform(kv, (n_embd, head_size), jnp.float32, -wscale, wscale)

        out = jax.block_until_ready(masked_head(x, wk, wq, wv))
        ref = masked_head_ref(x, wk, wq, wv)
        assert out.shape == (B, T, head_size)
        # bf16 MXU operands (+ bf16 exp on v6e/v7x) + approx reciprocal -> relaxed tol.
        assert jnp.allclose(out, ref, atol=3e-2, rtol=3e-2), f"mismatch at B={B}, T={T}"

    run_case(2, 16)           # small shape
    run_case(2, block_size)   # full block_size: exercises the (256,256) path
    print("KERNEL_OK")
</pallas_src>

<mosaic_0001>
module attributes {stable_mosaic.version = 11 : i64} {
  func.func @masked_head_kernel(%arg0: i32, %arg1: memref<1x16x192xf32, #tpu.memory_space<vmem>>, %arg2: memref<192x96xbf16, #tpu.memory_space<vmem>>, %arg3: memref<16x16xf32, #tpu.memory_space<vmem>>, %arg4: memref<1x16x32xf32, #tpu.memory_space<vmem>>) attributes {dimension_semantics = [#tpu.dimension_semantics<parallel>], iteration_bounds = array<i64: 2>, scalar_prefetch = 0 : i64, scratch_operands = 0 : i64, tpu.core_type = #tpu.core_type<tc>, window_params = [{transform_indices = @transform_0, window_bounds = array<i64: 1, 16, 192>}, {pipeline_mode = #tpu.pipeline_mode<synchronous>, transform_indices = @transform_1, window_bounds = array<i64: 192, 96>}, {pipeline_mode = #tpu.pipeline_mode<synchronous>, transform_indices = @transform_2, window_bounds = array<i64: 16, 16>}, {transform_indices = @transform_3, window_bounds = array<i64: 1, 16, 32>}]} {
    %c0 = arith.constant 0 : index
    %c0_0 = arith.constant 0 : index
    %c0_1 = arith.constant 0 : index
    %0 = vector.load %arg1[%c0, %c0_0, %c0_1] : memref<1x16x192xf32, #tpu.memory_space<vmem>>, vector<1x16x192xf32>
    %1 = vector.shape_cast %0 : vector<1x16x192xf32> to vector<16x192xf32>
    %2 = arith.truncf %1 : vector<16x192xf32> to vector<16x192xbf16>
    %c0_2 = arith.constant 0 : index
    %c0_3 = arith.constant 0 : index
    %3 = vector.load %arg2[%c0_2, %c0_3] : memref<192x96xbf16, #tpu.memory_space<vmem>>, vector<192x96xbf16>
    %cst = arith.constant dense<0.000000e+00> : vector<16x96xf32>
    %4 = tpu.matmul %2, %3, %cst {dimension_numbers = #tpu.dot_dimension_numbers<[1], [0], [0], [1], [0, 0, 1, 1], [], []>} : vector<16x192xbf16>, vector<192x96xbf16>, vector<16x96xf32> -> vector<16x96xf32>
    %5 = vector.shape_cast %4 : vector<16x96xf32> to vector<1x16x96xf32>
    %6 = vector.extract_strided_slice %5 {offsets = [0, 0, 0], sizes = [1, 16, 32], strides = [1, 1, 1]} : vector<1x16x96xf32> to vector<1x16x32xf32>
    %7 = arith.truncf %6 : vector<1x16x32xf32> to vector<1x16x32xbf16>
    %8 = vector.extract_strided_slice %5 {offsets = [0, 0, 32], sizes = [1, 16, 32], strides = [1, 1, 1]} : vector<1x16x96xf32> to vector<1x16x32xf32>
    %9 = arith.truncf %8 : vector<1x16x32xf32> to vector<1x16x32xbf16>
    %10 = vector.extract_strided_slice %5 {offsets = [0, 0, 64], sizes = [1, 16, 32], strides = [1, 1, 1]} : vector<1x16x96xf32> to vector<1x16x32xf32>
    %cst_4 = arith.constant 1.000000e+00 : f32
    %11 = vector.broadcast %cst_4 : f32 to vector<1x16x1xf32>
    %12 = tpu.concatenate %10, %11 in 2 : vector<1x16x32xf32>, vector<1x16x1xf32> -> vector<1x16x33xf32>
    %13 = arith.truncf %12 : vector<1x16x33xf32> to vector<1x16x33xbf16>
    "tpu.trace_start"() <{level = 10 : i32, message = "bqh,bkh->bqk"}> : () -> ()
    %cst_5 = arith.constant dense<0.000000e+00> : vector<1x16x16xf32>
    %14 = tpu.matmul %9, %7, %cst_5 {dimension_numbers = #tpu.dot_dimension_numbers<[2], [2], [1], [1], [0, 0, 0, 1, 1, 1], [0], [0]>} : vector<1x16x32xbf16>, vector<1x16x32xbf16>, vector<1x16x16xf32> -> vector<1x16x16xf32>
    "tpu.trace_stop"() : () -> ()
    %c0_6 = arith.constant 0 : index
    %c0_7 = arith.constant 0 : index
    %15 = vector.load %arg3[%c0_6, %c0_7] : memref<16x16xf32, #tpu.memory_space<vmem>>, vector<16x16xf32>
    %16 = vector.shape_cast %15 : vector<16x16xf32> to vector<1x16x16xf32>
    %17 = arith.addf %14, %16 : vector<1x16x16xf32>
    %cst_8 = arith.constant dense<0xFF800000> : vector<1x16xf32>
    %18 = vector.multi_reduction <maximumf>, %17, %cst_8 [2] : vector<1x16x16xf32> to vector<1x16xf32>
    %19 = vector.shape_cast %18 : vector<1x16xf32> to vector<1x16x1xf32>
    %20 = vector.broadcast %19 : vector<1x16x1xf32> to vector<1x16x16xf32>
    %21 = arith.subf %17, %20 : vector<1x16x16xf32>
    %22 = math.exp %21 : vector<1x16x16xf32>
    %23 = arith.truncf %22 : vector<1x16x16xf32> to vector<1x16x16xbf16>
    "tpu.trace_start"() <{level = 10 : i32, message = "bqk,bkh->bqh"}> : () -> ()
    %cst_9 = arith.constant dense<0.000000e+00> : vector<1x16x33xf32>
    %24 = tpu.matmul %23, %13, %cst_9 {dimension_numbers = #tpu.dot_dimension_numbers<[2], [1], [1], [2], [0, 0, 0, 1, 1, 2], [0], [0]>} : vector<1x16x16xbf16>, vector<1x16x33xbf16>, vector<1x16x33xf32> -> vector<1x16x33xf32>
    "tpu.trace_stop"() : () -> ()
    %25 = vector.extract_strided_slice %24 {offsets = [0, 0, 0], sizes = [1, 16, 32], strides = [1, 1, 1]} : vector<1x16x33xf32> to vector<1x16x32xf32>
    %26 = vector.extract_strided_slice %24 {offsets = [0, 0, 32], sizes = [1, 16, 1], strides = [1, 1, 1]} : vector<1x16x33xf32> to vector<1x16x1xf32>
    %27 = tpu.reciprocal %26 {approx = true} : vector<1x16x1xf32> -> vector<1x16x1xf32>
    %28 = vector.broadcast %27 : vector<1x16x1xf32> to vector<1x16x32xf32>
    %29 = arith.mulf %25, %28 : vector<1x16x32xf32>
    %c0_10 = arith.constant 0 : index
    %c0_11 = arith.constant 0 : index
    %c0_12 = arith.constant 0 : index
    %30 = vector.load %arg4[%c0_10, %c0_11, %c0_12] : memref<1x16x32xf32, #tpu.memory_space<vmem>>, vector<1x16x32xf32>
    tpu.vector_store %arg4[%c0_10, %c0_11, %c0_12], %29 {strides = array<i32>} : memref<1x16x32xf32, #tpu.memory_space<vmem>>, vector<1x16x32xf32>,
    return
  }
  func.func @transform_0(%arg0: i32) -> (i32, i32, i32) {
    %c0_i32 = arith.constant 0 : i32
    %c0_i32_0 = arith.constant 0 : i32
    %c0_i32_1 = arith.constant 0 : i32
    return %arg0, %c0_i32, %c0_i32_0 : i32, i32, i32
  }
  func.func @transform_1(%arg0: i32) -> (i32, i32) {
    %c0_i32 = arith.constant 0 : i32
    %c0_i32_0 = arith.constant 0 : i32
    %c0_i32_1 = arith.constant 0 : i32
    return %c0_i32, %c0_i32_0 : i32, i32
  }
  func.func @transform_2(%arg0: i32) -> (i32, i32) {
    %c0_i32 = arith.constant 0 : i32
    %c0_i32_0 = arith.constant 0 : i32
    %c0_i32_1 = arith.constant 0 : i32
    return %c0_i32, %c0_i32_0 : i32, i32
  }
  func.func @transform_3(%arg0: i32) -> (i32, i32, i32) {
    %c0_i32 = arith.constant 0 : i32
    %c0_i32_0 = arith.constant 0 : i32
    %c0_i32_1 = arith.constant 0 : i32
    return %arg0, %c0_i32, %c0_i32_0 : i32, i32, i32
  }
}

</mosaic_0001>

<llo_original>
// kernel: masked_head.1
$region0: #{masked_head.1}
  #allocation0 [shape = 'u32[]', space=smem, size = 0x4, offset = 0x4, fixed_abs, tag = 'smem constant byte address 0x4 - core index']
  #allocation1 [shape = 'u32[144,128]{1,0:T(1,128)}', space=vmem, size = 0x12000, scoped, tag = 'internal scratch']
  %s0 = inlined_call_operand.vmem [shape: f32[2,16,192], index: 0, kind: input, shape index: {}]
  %s1 = inlined_call_operand.vmem [shape: bf16[192,96], index: 1, kind: input, shape index: {}]
  %s2 = inlined_call_operand.vmem [shape: f32[16,16], index: 2, kind: input, shape index: {}]
  %s3 = inlined_call_operand.hbm [shape: f32[2,16,32], index: 3, kind: output, shape index: {}]
  %s4 = sld [smem:[#allocation0]]
  $region45: #{masked_head.1} parent=0
    _
  %s6 = ssub.s32 1, %s4
  %s7 = scalar_select 0, %s6, %s4
  $region1: #{masked_head.1} parent=0
    #allocation2 [shape = 'u8[16384]{0}', space=vmem, size = 0x4000, scoped, tag = 'output window, operand 0']
    #allocation3 [shape = 's32[2]{0}', space=sflag, size = 0x8, scoped, tag = 'scoped memory for masked_head.1']
    %8 = vsyncpa [#allocation3], 0
    %s9 = scalar_lea.sflag [#allocation3], 1
    %10 = vsyncpa %s9, 0
    loop: start=0, step=1, limit=4
    $region2: #{masked_head.1} parent=1 // loop_pre_header
      _
    $region3: #{masked_head.1} parent=1 // loop_header
      %s12 = sphi 0, %s16
      %p13 = scmp.ge.s32.totalorder %s12, 4
      %s22 = sphi 0, %s24
      %s25 = sphi 0, %s22
      %s26 = sphi 0, %s25
      %s42 = sphi 0, %s26
      %s46 = sphi 0, %s46
      %s48 = sphi 0, %s46
      %s49 = sphi 0, %s48
      %s63 = sphi 0, %s49
      %s67 = sphi 0, %s67
      %s69 = sphi 0, %s67
      %s70 = sphi 0, %s69
      %s84 = sphi 0, %s70
      %s90 = sphi 0, %s92
      %s93 = sphi 0, %s90
      %s94 = sphi 0, %s93
      %s110 = sphi 0, %s94
    $region4: #{masked_head.1} parent=1 // loop_header_branch
      %15 = sbr.rel (%p13) target = $region8
    $region5: #{masked_head.1} parent=1 // loop_body
      %s17 = ssub.s32 %s12, 1
      %s18 = ssub.s32 %s12, 2
      %s19 = sadd.s32 %s12, 1
      %s20 = ssub.s32 %s12, %s19
      %p21 = scmp.eq.s32.totalorder %s20, 0
      %s23 = sadd.s32 %s22, 1
      %s24 = scalar_select %p21, %s22, %s23
      %p27 = pneg %p21
      %p28 = scmp.eq.s32.totalorder %s12, 1
      %p29 = por %p27, %p28
      %p30 = scmp.ne.s32.totalorder %s22, %s25
      %p31 = scmp.eq.s32.totalorder %s12, 0
      %p32 = por %p30, %p31
      %p33 = scmp.ne.s32.totalorder %s22, %s25
      %p34 = scmp.eq.s32.totalorder %s17, 1
      %p35 = por %p33, %p34
      %p36 = scmp.ne.s32.totalorder %s25, %s26
      %p37 = scmp.eq.s32.totalorder %s17, 0
      %p38 = por %p36, %p37
      %p39 = scmp.ne.s32.totalorder %s25, %s26
      %p40 = scmp.eq.s32.totalorder %s18, 1
      %p41 = por %p39, %p40
      %p43 = scmp.ne.s32.totalorder %s26, %s42
      %p44 = scmp.eq.s32.totalorder %s18, 0
      %p45 = por %p43, %p44
      %s47 = sadd.s32 %s46, 1
      %p50 = scmp.eq.s32.totalorder %s12, 1
      %p51 = scmp.ne.s32.totalorder %s46, %s48
      %p52 = scmp.eq.s32.totalorder %s12, 0
      %p53 = por %p51, %p52
      %p54 = scmp.ne.s32.totalorder %s46, %s48
      %p55 = scmp.eq.s32.totalorder %s17, 1
      %p56 = por %p54, %p55
      %p57 = scmp.ne.s32.totalorder %s48, %s49
      %p58 = scmp.eq.s32.totalorder %s17, 0
      %p59 = por %p57, %p58
      %p60 = scmp.ne.s32.totalorder %s48, %s49
      %p61 = scmp.eq.s32.totalorder %s18, 1
      %p62 = por %p60, %p61
      %p64 = scmp.ne.s32.totalorder %s49, %s63
      %p65 = scmp.eq.s32.totalorder %s18, 0
      %p66 = por %p64, %p65
      %s68 = sadd.s32 %s67, 1
      %p71 = scmp.eq.s32.totalorder %s12, 1
      %p72 = scmp.ne.s32.totalorder %s67, %s69
      %p73 = scmp.eq.s32.totalorder %s12, 0
      %p74 = por %p72, %p73
      %p75 = scmp.ne.s32.totalorder %s67, %s69
      %p76 = scmp.eq.s32.totalorder %s17, 1
      %p77 = por %p75, %p76
      %p78 = scmp.ne.s32.totalorder %s69, %s70
      %p79 = scmp.eq.s32.totalorder %s17, 0
      %p80 = por %p78, %p79
      %p81 = scmp.ne.s32.totalorder %s69, %s70
      %p82 = scmp.eq.s32.totalorder %s18, 1
      %p83 = por %p81, %p82
      %p85 = scmp.ne.s32.totalorder %s70, %s84
      %p86 = scmp.eq.s32.totalorder %s18, 0
      %p87 = por %p85, %p86
      %s88 = ssub.s32 %s12, %s19
      %p89 = scmp.eq.s32.totalorder %s88, 0
      %s91 = sadd.s32 %s90, 1
      %s92 = scalar_select %p89, %s90, %s91
      %p95 = pneg %p89
      %p96 = scmp.eq.s32.totalorder %s12, 1
      %p97 = por %p95, %p96
      %p98 = scmp.ne.s32.totalorder %s90, %s93
      %p99 = scmp.eq.s32.totalorder %s12, 0
      %p100 = por %p98, %p99
      %p101 = scmp.ne.s32.totalorder %s90, %s93
      %p102 = scmp.eq.s32.totalorder %s17, 1
      %p103 = por %p101, %p102
      %p104 = scmp.ne.s32.totalorder %s93, %s94
      %p105 = scmp.eq.s32.totalorder %s17, 0
      %p106 = por %p104, %p105
      %p107 = scmp.ne.s32.totalorder %s93, %s94
      %p108 = scmp.eq.s32.totalorder %s18, 1
      %p109 = por %p107, %p108
      %p111 = scmp.ne.s32.totalorder %s94, %s110
      %p112 = scmp.eq.s32.totalorder %s18, 0
      %p113 = por %p111, %p112
      %p114 = scmp.le.s32.totalorder 1, %s12
      %p115 = scmp.lt.s32.totalorder %s12, 3
      %p116 = pnand %p114, %p115
      %p117 = pneg %p116
      // Predicated region
      $region9: #{masked_head.1} parent=5 // pred_check
        _
      $region10: #{masked_head.1} parent=5 // pred_check_branch
        %119 = sbr.rel (%p116) target = $region12
      $region11: #{masked_head.1} parent=5 // pred_region
        %s120 = ssub.s32 %s12, 1
        // Predicated region
        $region13: #{masked_head.1} parent=11 // pred_check
          %p121 = pneg %p59
        $region14: #{masked_head.1} parent=11 // pred_check_branch
          %123 = sbr.rel (%p121) target = $region16
        $region15: #{masked_head.1} parent=11 // pred_region
          _
        $region16: #{masked_head.1} parent=11 // pred_fallthru
          _
        // Predicated region
        $region17: #{masked_head.1} parent=11 // pred_check
          %p124 = pneg %p80
        $region18: #{masked_head.1} parent=11 // pred_check_branch
          %126 = sbr.rel (%p124) target = $region20
        $region19: #{masked_head.1} parent=11 // pred_region
          _
        $region20: #{masked_head.1} parent=11 // pred_fallthru
          _
      $region12: #{masked_head.1} parent=5 // pred_fallthru
        _
      %p127 = scmp.lt.s32.totalorder %s12, 2
      // Predicated region
      $region21: #{masked_head.1} parent=5 // pred_check
        %p128 = pneg %p127
      $region22: #{masked_head.1} parent=5 // pred_check_branch
        %130 = sbr.rel (%p128) target = $region24
      $region23: #{masked_head.1} parent=5 // pred_region
        // Predicated region
        $region25: #{masked_head.1} parent=23 // pred_check
          %p131 = pneg %p32
        $region26: #{masked_head.1} parent=23 // pred_check_branch
          %133 = sbr.rel (%p131) target = $region28
        $region27: #{masked_head.1} parent=23 // pred_region
          %p134 = scmp.lt.s32.totalorder %s12, 1
          %s135 = scalar_select %p134, %s12, 1
          %s136 = smul.addr %s135, 4
          %s137 = smul.addr %s136, 8
          %s138 = scalar_lea.vmem %s0, %s137
        $region28: #{masked_head.1} parent=23 // pred_fallthru
          _
      $region24: #{masked_head.1} parent=5 // pred_fallthru
        _
      %p139 = scmp.le.s32.totalorder 1, %s12
      %p140 = scmp.lt.s32.totalorder %s12, 3
      %p141 = pnand %p139, %p140
      %p142 = pneg %p141
      // Predicated region
      $region29: #{masked_head.1} parent=5 // pred_check
        _
      $region30: #{masked_head.1} parent=5 // pred_check_branch
        %144 = sbr.rel (%p141) target = $region32
      $region31: #{masked_head.1} parent=5 // pred_region
        %s145 = ssub.s32 %s12, 1
        %p146 = scmp.lt.s32.totalorder %s17, 1
        %s147 = scalar_select %p146, %s17, 1
        %s148 = smul.addr %s147, 4
        %s149 = smul.addr %s148, 8
        %s150 = scalar_lea.vmem %s0, %s149
        %p151 = pneg %p38
        %p152 = pneg %p35
        %p153 = pneg %p59
        %p154 = pneg %p56
        %p155 = pneg %p80
        %p156 = pneg %p77
        %p157 = pneg %p106
        %p158 = pneg %p103
        %s159 = sand.u32 %s93, 1
        %s160 = scalar_lea.sflag [#allocation3], %s159
        %s161 = sand.u32 %s93, 1
        %s162 = smul.addr %s161, 16
        %s163 = scalar_lea.vmem [#allocation2], %s162
        %p164 = scmp.lt.s32.totalorder %s17, 1
        %s165 = scalar_select %p164, %s17, 1
        %s166 = smul.addr %s165, 4
        %s167 = smul.addr %s166, 8
        %s168 = scalar_lea.vmem %s0, %s167
        %v170 = vld [vmem:[%s168] sm:$0xff]
        %v171 = vld [vmem:[%s168 + $0x8] sm:$0xff]
        %v172 = vld [vmem:[%s168 + $0x10] sm:$0xff]
        %v173 = vld [vmem:[%s168 + $0x18] sm:$0xff]
        %v174 = vpack.c.bf16 %v172, %v170
        %v175 = vpack.c.bf16 %v173, %v171
        %v176 = vld [vmem:[%s1] sm:$0xf]
        %v177 = vld [vmem:[%s1 + $0x4] sm:$0xf]
        %v178 = vld [vmem:[%s1 + $0x8] sm:$0xf]
        %v179 = vld [vmem:[%s1 + $0xc] sm:$0xf]
        %v180 = vld [vmem:[%s1 + $0x10] sm:$0xf]
        %v181 = vld [vmem:[%s1 + $0x14] sm:$0xf]
        %v182 = vld [vmem:[%s1 + $0x18] sm:$0xf]
        %v183 = vld [vmem:[%s1 + $0x1c] sm:$0xf]
        %v184 = vld [vmem:[%s1 + $0x20] sm:$0xf]
        %v185 = vld [vmem:[%s1 + $0x24] sm:$0xf]
        %v186 = vld [vmem:[%s1 + $0x28] sm:$0xf]
        %v187 = vld [vmem:[%s1 + $0x2c] sm:$0xf]
        %v188 = vld [vmem:[%s1 + $0x30] sm:$0xf]
        %v189 = vld [vmem:[%s1 + $0x34] sm:$0xf]
        %v190 = vld [vmem:[%s1 + $0x38] sm:$0xf]
        %v191 = vld [vmem:[%s1 + $0x3c] sm:$0xf]
        %v192 = vld [vmem:[%s1 + $0x40] sm:$0xf]
        %v193 = vld [vmem:[%s1 + $0x44] sm:$0xf]
        %v194 = vld [vmem:[%s1 + $0x48] sm:$0xf]
        %v195 = vld [vmem:[%s1 + $0x4c] sm:$0xf]
        %v196 = vld [vmem:[%s1 + $0x50] sm:$0xf]
        %v197 = vld [vmem:[%s1 + $0x54] sm:$0xf]
        %v198 = vld [vmem:[%s1 + $0x58] sm:$0xf]
        %v199 = vld [vmem:[%s1 + $0x5c] sm:$0xf]
        %v224 = vunpack.c.l.b16 %v176
        %v225 = vunpack.c.l.b16 %v177
        %v226 = vunpack.c.l.b16 %v178
        %v227 = vunpack.c.l.b16 %v179
        %v228 = vunpack.c.l.b16 %v180
        %v229 = vunpack.c.l.b16 %v181
        %v230 = vunpack.c.l.b16 %v182
        %v231 = vunpack.c.l.b16 %v183
        %v232 = vunpack.c.l.b16 %v184
        %v233 = vunpack.c.l.b16 %v185
        %v234 = vunpack.c.l.b16 %v186
        %v235 = vunpack.c.l.b16 %v187
        %v236 = vunpack.c.l.b16 %v188
        %v237 = vunpack.c.l.b16 %v189
        %v238 = vunpack.c.l.b16 %v190
        %v239 = vunpack.c.l.b16 %v191
        %v240 = vunpack.c.l.b16 %v192
        %v241 = vunpack.c.l.b16 %v193
        %v242 = vunpack.c.l.b16 %v194
        %v243 = vunpack.c.l.b16 %v195
        %v244 = vunpack.c.l.b16 %v196
        %v245 = vunpack.c.l.b16 %v197
        %v246 = vunpack.c.l.b16 %v198
        %v247 = vunpack.c.l.b16 %v199
        %v248 = vpack.c.b16 %v225, %v224
        %v249 = vpack.c.b16 %v227, %v226
        %v250 = vpack.c.b16 %v229, %v228
        %v251 = vpack.c.b16 %v231, %v230
        %v252 = vpack.c.b16 %v233, %v232
        %v253 = vpack.c.b16 %v235, %v234
        %v254 = vpack.c.b16 %v237, %v236
        %v255 = vpack.c.b16 %v239, %v238
        %v256 = vpack.c.b16 %v241, %v240
        %v257 = vpack.c.b16 %v243, %v242
        %v258 = vpack.c.b16 %v245, %v244
        %v259 = vpack.c.b16 %v247, %v246
        %vm272 = vcmask 523264
        %v274 = vsel %vm272, %v175, 0
        %276 = vmatprep.subr.bf16.mxu0 0
        %277 = vmatpush1.bf16.msra.mxu0 %v248
        %278 = vmatprep.subr.bf16.mxu0 0
        %279 = vmatpush1.bf16.msra.mxu0 %v249
        %280 = vmatprep.subr.bf16.mxu0 0
        %281 = vmatpush1.bf16.msra.mxu0 %v250
        %282 = vmatprep.subr.bf16.mxu0 0
        %283 = vmatpush1.bf16.msra.mxu0 %v251
        %284 = vmatprep.subr.bf16.mxu0 0
        %285 = vmatpush1.bf16.msra.mxu0 %v252
        %286 = vmatprep.subr.bf16.mxu0 0
        %287 = vmatpush1.bf16.msra.mxu0 %v253
        %288 = vmatprep.subr.bf16.mxu0 0
        %289 = vmatpush1.bf16.msra.mxu0 %v254
        %290 = vmatprep.subr.bf16.mxu0 0
        %291 = vmatpush1.bf16.msra.mxu0 %v255
        %292 = vmatprep.subr.bf16.mxu0 0
        %293 = vmatpush1.bf16.msra.mxu0 %v256
        %294 = vmatprep.subr.bf16.mxu0 0
        %295 = vmatpush1.bf16.msra.mxu0 %v257
        %296 = vmatprep.subr.bf16.mxu0 0
        %297 = vmatpush1.bf16.msra.mxu0 %v258
        %298 = vmatprep.subr.bf16.mxu0 0
        %299 = vmatpush1.bf16.msra.mxu0 %v259
        %300 = vmatprep.subr.bf16.mxu0 0
        %301 = vmatpush1.bf16.msra.mxu0 0
        %302 = vmatprep.subr.bf16.mxu0 0
        %303 = vmatpush1.bf16.msra.mxu0 0
        %304 = vmatprep.subr.bf16.mxu0 0
        %305 = vmatpush1.bf16.msra.mxu0 0
        %306 = vmatprep.subr.bf16.mxu0 0
        %307 = vmatpush1.bf16.msra.mxu0 0
        %308 = vmatprep.mubr.bf16.mxu0 %v274
        %309 = vmatmul.mubr.bf16.gmra.mrb[0].mxu0 %v174
        %v310 = vpop.f32.mrb[0].mxu0
        %v311 = vadd.f32 0.0, %v310
        %v312 = vpop.f32.mrb[0].mxu0
        %v313 = vpop.f32.mrb[0].mxu0
        %v314 = vadd.f32 0.0, %v313
        %v315 = vpop.f32.mrb[0].mxu0
        %316 = vdwg.mxu0
        %v317 = vpack.c.bf16 %v314, %v311
        %320 = vrot.lane.b32.xlu0 %v311, 64
        %v321 = vpop.permute.xlu0 %320
        %322 = vrot.lane.b32.xlu0 %v314, 64
        %v323 = vpop.permute.xlu0 %322
        %vm326 = vcmask 261120
        %v327 = vsel %vm326, %v321, 1.0
        %v328 = vsel %vm326, %v323, 1.0
        %v329 = vpack.c.bf16 %v328, %v327
        %v330 = vld [vmem:[%s2] sm:$0xff]
        %v331 = vld [vmem:[%s2 + $0x8] sm:$0xff]
        %333 = vrot.lane.b32.xlu0 %v317, 96
        %v334 = vpop.permute.xlu0 %333
        %v336 = vsel %vm326, %v334, 0
        %v339 = vsel %vm326, %v317, 0
        %341 = vmatprep.subr.bf16.mxu0 0
        %342 = vmatpush1.bf16.xpose.msra.mxu0 %v339
        %343 = vmatprep.subr.bf16.mxu0 0
        %344 = vmatpush1.bf16.xpose.msra.mxu0 0
        %345 = vmatprep.subr.bf16.mxu0 0
        %346 = vmatpush1.bf16.xpose.msra.mxu0 0
        %347 = vmatprep.subr.bf16.mxu0 0
        %348 = vmatpush1.bf16.xpose.msra.mxu0 0
        %349 = vmatprep.subr.bf16.mxu0 0
        %350 = vmatpush1.bf16.xpose.msra.mxu0 0
        %351 = vmatprep.subr.bf16.mxu0 0
        %352 = vmatpush1.bf16.xpose.msra.mxu0 0
        %353 = vmatprep.subr.bf16.mxu0 0
        %354 = vmatpush1.bf16.xpose.msra.mxu0 0
        %355 = vmatprep.subr.bf16.mxu0 0
        %356 = vmatpush1.bf16.xpose.msra.mxu0 0
        %357 = vmatprep.subr.bf16.mxu0 0
        %358 = vmatpush1.bf16.xpose.msra.mxu0 0
        %359 = vmatprep.subr.bf16.mxu0 0
        %360 = vmatpush1.bf16.xpose.msra.mxu0 0
        %361 = vmatprep.subr.bf16.mxu0 0
        %362 = vmatpush1.bf16.xpose.msra.mxu0 0
        %363 = vmatprep.subr.bf16.mxu0 0
        %364 = vmatpush1.bf16.xpose.msra.mxu0 0
        %365 = vmatprep.subr.bf16.mxu0 0
        %366 = vmatpush1.bf16.xpose.msra.mxu0 0
        %367 = vmatprep.subr.bf16.mxu0 0
        %368 = vmatpush1.bf16.xpose.msra.mxu0 0
        %369 = vmatprep.subr.bf16.mxu0 0
        %370 = vmatpush1.bf16.xpose.msra.mxu0 0
        %371 = vmatprep.subr.bf16.mxu0 0
        %372 = vmatpush1.bf16.xpose.msra.mxu0 0
        %373 = vmatprep.mubr.bf16.mxu0 0
        %374 = vmatmul.mubr.bf16.gmra.mrb[0].mxu0 %v336
        %v375 = vpop.f32.mrb[0].mxu0
        %v376 = vadd.f32 %v330, %v375
        %v377 = vpop.f32.mrb[0].mxu0
        %v378 = vpop.f32.mrb[0].mxu0
        %v379 = vadd.f32 %v331, %v378
        %v380 = vpop.f32.mrb[0].mxu0
        %381 = vdwg.mxu0
        %vm382 = vcmask 130048
        %v383 = vsel %vm382, %v376, -inf
        %384 = vmax.xlane.f32.xlu0 %v383
        %v385 = vpop.xlane.xlu0 %384
        %v386 = vsel %vm382, %v379, -inf
        %387 = vmax.xlane.f32.xlu0 %v386
        %v388 = vpop.xlane.xlu0 %387
        %v389 = vsub.f32 %v376, %v385
        %v390 = vsub.f32 %v379, %v388
        %v391 = vmul.f32 %v389, 1.442695
        %v392 = vpow.pop %v391
        %v393 = vmul.f32 %v390, 1.442695
        %v394 = vpow.pop %v393
        %v395 = vpack.c.bf16 %v394, %v392
        %v397 = vsel %vm382, %v395, 0
        %399 = vmatprep.subr.bf16.mxu0 0
        %400 = vmatpush1.bf16.msra.mxu0 %v329
        %401 = vmatprep.subr.bf16.mxu0 0
        %402 = vmatpush1.bf16.msra.mxu0 0
        %403 = vmatprep.subr.bf16.mxu0 0
        %404 = vmatpush1.bf16.msra.mxu0 0
        %405 = vmatprep.subr.bf16.mxu0 0
        %406 = vmatpush1.bf16.msra.mxu0 0
        %407 = vmatprep.subr.bf16.mxu0 0
        %408 = vmatpush1.bf16.msra.mxu0 0
        %409 = vmatprep.subr.bf16.mxu0 0
        %410 = vmatpush1.bf16.msra.mxu0 0
        %411 = vmatprep.subr.bf16.mxu0 0
        %412 = vmatpush1.bf16.msra.mxu0 0
        %413 = vmatprep.subr.bf16.mxu0 0
        %414 = vmatpush1.bf16.msra.mxu0 0
        %415 = vmatprep.subr.bf16.mxu0 0
        %416 = vmatpush1.bf16.msra.mxu0 0
        %417 = vmatprep.subr.bf16.mxu0 0
        %418 = vmatpush1.bf16.msra.mxu0 0
        %419 = vmatprep.subr.bf16.mxu0 0
        %420 = vmatpush1.bf16.msra.mxu0 0
        %421 = vmatprep.subr.bf16.mxu0 0
        %422 = vmatpush1.bf16.msra.mxu0 0
        %423 = vmatprep.subr.bf16.mxu0 0
        %424 = vmatpush1.bf16.msra.mxu0 0
        %425 = vmatprep.subr.bf16.mxu0 0
        %426 = vmatpush1.bf16.msra.mxu0 0
        %427 = vmatprep.subr.bf16.mxu0 0
        %428 = vmatpush1.bf16.msra.mxu0 0
        %429 = vmatprep.subr.bf16.mxu0 0
        %430 = vmatpush1.bf16.msra.mxu0 0
        %431 = vmatprep.mubr.bf16.mxu0 0
        %432 = vmatmul.mubr.bf16.gmra.mrb[0].mxu0 %v397
        %v433 = vpop.f32.mrb[0].mxu0
        %v434 = vadd.f32 0.0, %v433
        %v435 = vpop.f32.mrb[0].mxu0
        %v436 = vpop.f32.mrb[0].mxu0
        %v437 = vadd.f32 0.0, %v436
        %v438 = vpop.f32.mrb[0].mxu0
        %439 = vdwg.mxu0
        %v440 = vrcp.pop %v434
        %v441 = vrcp.pop %v437
        %443 = vset.pattern.permute.xlu0 32
        %444 = vperm.xlu0 %443, %v440
        %v445 = vpop.permute.xlu0 %444
        %448 = vset.pattern.permute.xlu0 32
        %449 = vperm.xlu0 %448, %v441
        %v450 = vpop.permute.xlu0 %449
        %v452 = vmul.f32 %v434, %v445
        %v453 = vmul.f32 %v437, %v450
        %454 = vst.msk [vmem:[%s163] sm:$0xff] %vm326, %v452
        %455 = vst.msk [vmem:[%s163 + $0x8] sm:$0xff] %vm326, %v453
        %s456 = sand.u32 %s93, 1
        %s457 = scalar_lea.sflag [#allocation3], %s456
        %s458 = sand.u32 %s93, 1
        %s459 = smul.addr %s458, 16
        %s460 = scalar_lea.vmem [#allocation2], %s459
        // Predicated region
        $region33: #{masked_head.1} parent=31 // pred_check
          %p461 = pneg %p103
        $region34: #{masked_head.1} parent=31 // pred_check_branch
          %463 = sbr.rel (%p461) target = $region36
        $region35: #{masked_head.1} parent=31 // pred_region
          %s465 = ssub.s32 256, 256
          %466 = vsyncadd %s457, %s465
          %s467 = smul.addr %s17, 2
          %s468 = smul.addr %s467, 128
          %s469 = scalar_lea.hbm %s3, %s468
          %s470 = sshll.u32 %s460, 4
          %s471 = int_to_ptr.vmem [resolvable:$true] %s470
          %476 = dma.vmem_to_hbm [thread:$0]  %s471, 256, %s469, %s457, 128, 128, 8
        $region36: #{masked_head.1} parent=31 // pred_fallthru
          _
      $region32: #{masked_head.1} parent=5 // pred_fallthru
        _
      %p477 = scmp.le.s32.totalorder 2, %s12
      // Predicated region
      $region37: #{masked_head.1} parent=5 // pred_check
        %p478 = pneg %p477
      $region38: #{masked_head.1} parent=5 // pred_check_branch
        %480 = sbr.rel (%p478) target = $region40
      $region39: #{masked_head.1} parent=5 // pred_region
        %s481 = ssub.s32 %s12, 2
        // Predicated region
        $region41: #{masked_head.1} parent=39 // pred_check
          %p482 = pneg %p109
        $region42: #{masked_head.1} parent=39 // pred_check_branch
          %484 = sbr.rel (%p482) target = $region44
        $region43: #{masked_head.1} parent=39 // pred_region
          %s485 = sand.u32 %s94, 1
          %s486 = scalar_lea.sflag [#allocation3], %s485
          %s487 = sand.u32 %s94, 1
          %s488 = smul.addr %s487, 16
          %s489 = scalar_lea.vmem [#allocation2], %s488
          %490 = dma.done %s486, 256
        $region44: #{masked_head.1} parent=39 // pred_fallthru
          _
      $region40: #{masked_head.1} parent=5 // pred_fallthru
        _
    $region6: #{masked_head.1} parent=1 // loop_footer
      %s16 = sadd.s32 1, %s12
    $region7: #{masked_head.1} parent=1 // loop_footer_branch
      %11 = sbr.rel target = $region3
    $region8: #{masked_head.1} parent=1 // loop_exit
      _
    %491 = vsyncpa [#allocation3], 1
    %s492 = scalar_lea.sflag [#allocation3], 1
    %493 = vsyncpa %s492, 1

</llo_original>
